<compile_context>
chip_gen: v6e
topology: v6e:2x2x1
jax: 0.10.0
libtpu: 0.0.40
codegen_flags: <defaults>
</compile_context>

<pallas_src>
import jax
import jax.numpy as jnp
from jax.experimental import pallas as pl
from jax.experimental.pallas import tpu as pltpu

Z_DIM = 2
H_DIM = 128
DEFAULT_BLOCK_M = 2048  # batch tile (rows); single grid step whenever B <= this


def _round_up(n, m):
    return ((n + m - 1) // m) * m


def _generator_kernel(x_ref, w1_ref, b1_ref, w2_ref, b2_ref, w3_ref, b3_ref, o_ref):
    x = x_ref[...]                          # (bm, Z_DIM) f32
    w1 = w1_ref[...]                        # (Z_DIM, H_DIM)

    # fc1: K = 2 contraction done on the VPU (two broadcast mul-adds), not the MXU.
    h = b1_ref[...] + x[:, 0:1] * w1[0:1, :] + x[:, 1:2] * w1[1:2, :]
    h = jnp.maximum(h, 0.0)

    # fc2: (bm, 128) @ (128, 128) on the MXU.
    h = jnp.dot(h, w2_ref[...], preferred_element_type=jnp.float32) + b2_ref[...]
    h = jnp.maximum(h, 0.0)

    # fc3: narrow (bm, 128) @ (128, Z_DIM); only the 2 useful columns are
    # computed and stored (no padded lanes, no wasted HBM writeback).
    out = jnp.dot(h, w3_ref[...], preferred_element_type=jnp.float32) + b3_ref[...]
    o_ref[...] = out.astype(o_ref.dtype)


def _choose_tiling(B, block_m):
    """Pick (bm, steps): bm is a multiple of 8; steps == 1 for small B, otherwise
    an even step count so v7x's 2 TensorCores split the grid evenly (no-op on
    single-TC v5e/v6e)."""
    steps = -(-B // block_m)               # ceil div
    if steps > 1 and steps % 2 == 1:
        steps += 1                         # even step count for megacore balance
    bm = _round_up(-(-B // steps), 8)
    return bm, steps


def generator_forward(x, params, block_m=DEFAULT_BLOCK_M):
    """x: (B, Z_DIM) float32. params: dict of w1,b1,w2,b2,w3,b3 (W as (in, out))."""
    B, zd = x.shape
    assert zd == Z_DIM
    bm, steps = _choose_tiling(B, block_m)
    Bp = bm * steps
    xp = x if Bp == B else jnp.pad(x, ((0, Bp - B), (0, 0)))

    out = pl.pallas_call(
        _generator_kernel,
        out_shape=jax.ShapeDtypeStruct((Bp, Z_DIM), jnp.float32),
        grid=(steps,),
        in_specs=[
            pl.BlockSpec((bm, Z_DIM), lambda i: (i, 0)),       # x tile (batch-tiled)
            pl.BlockSpec((Z_DIM, H_DIM), lambda i: (0, 0)),    # w1 (VMEM-resident)
            pl.BlockSpec((1, H_DIM), lambda i: (0, 0)),        # b1
            pl.BlockSpec((H_DIM, H_DIM), lambda i: (0, 0)),    # w2
            pl.BlockSpec((1, H_DIM), lambda i: (0, 0)),        # b2
            pl.BlockSpec((H_DIM, Z_DIM), lambda i: (0, 0)),    # w3
            pl.BlockSpec((1, Z_DIM), lambda i: (0, 0)),        # b3
        ],
        out_specs=pl.BlockSpec((bm, Z_DIM), lambda i: (i, 0)),
        compiler_params=pltpu.CompilerParams(
            dimension_semantics=("parallel",),                 # shard batch across TCs (v7x)
        ),
    )(xp, params["w1"], params["b1"], params["w2"], params["b2"],
      params["w3"], params["b3"])

    return out if Bp == B else out[:B]


def init_params(key):
    """Deterministic init mimicking PyTorch's default U(-1/sqrt(fan_in), 1/sqrt(fan_in))."""
    ks = jax.random.split(key, 6)

    def lin(kw, kb, fan_in, fan_out):
        bound = 1.0 / jnp.sqrt(fan_in)
        w = jax.random.uniform(kw, (fan_in, fan_out), jnp.float32, -bound, bound)
        b = jax.random.uniform(kb, (1, fan_out), jnp.float32, -bound, bound)
        return w, b

    w1, b1 = lin(ks[0], ks[1], Z_DIM, H_DIM)
    w2, b2 = lin(ks[2], ks[3], H_DIM, H_DIM)
    w3, b3 = lin(ks[4], ks[5], H_DIM, Z_DIM)
    return {"w1": w1, "b1": b1, "w2": w2, "b2": b2, "w3": w3, "b3": b3}


def _ref(x, p):
    h = jnp.maximum(x @ p["w1"] + p["b1"], 0.0)
    h = jnp.maximum(h @ p["w2"] + p["b2"], 0.0)
    return h @ p["w3"] + p["b3"]


if __name__ == "__main__":
    key = jax.random.PRNGKey(0)
    k_params, k_x1, k_x2 = jax.random.split(key, 3)
    params = init_params(k_params)

    # Small batch (single grid step).
    x_small = jax.random.normal(k_x1, (8, Z_DIM), jnp.float32)
    out_small = generator_forward(x_small, params)
    jax.block_until_ready(out_small)
    assert out_small.shape == (8, Z_DIM)
    assert jnp.allclose(out_small, _ref(x_small, params), atol=1e-5, rtol=1e-5)

    # Non-tile-multiple batch, single step under the default tile (exercises padding).
    x_mid = jax.random.normal(k_x2, (300, Z_DIM), jnp.float32)
    out_mid = generator_forward(x_mid, params)
    jax.block_until_ready(out_mid)
    assert out_mid.shape == (300, Z_DIM)
    assert jnp.allclose(out_mid, _ref(x_mid, params), atol=1e-5, rtol=1e-5)

    # Small block_m override: exercises the multi-step (even) grid + row padding path.
    out_grid = generator_forward(x_mid, params, block_m=64)
    jax.block_until_ready(out_grid)
    assert out_grid.shape == (300, Z_DIM)
    assert jnp.allclose(out_grid, _ref(x_mid, params), atol=1e-5, rtol=1e-5)

    print("KERNEL_OK")
</pallas_src>

<mosaic_0001>
module attributes {stable_mosaic.version = 11 : i64} {
  func.func @_generator_kernel(%arg0: i32, %arg1: memref<8x2xf32, #tpu.memory_space<vmem>>, %arg2: memref<2x128xf32, #tpu.memory_space<vmem>>, %arg3: memref<1x128xf32, #tpu.memory_space<vmem>>, %arg4: memref<128x128xf32, #tpu.memory_space<vmem>>, %arg5: memref<1x128xf32, #tpu.memory_space<vmem>>, %arg6: memref<128x2xf32, #tpu.memory_space<vmem>>, %arg7: memref<1x2xf32, #tpu.memory_space<vmem>>, %arg8: memref<8x2xf32, #tpu.memory_space<vmem>>) attributes {dimension_semantics = [#tpu.dimension_semantics<parallel>], iteration_bounds = array<i64: 1>, scalar_prefetch = 0 : i64, scratch_operands = 0 : i64, tpu.core_type = #tpu.core_type<tc>, window_params = [{transform_indices = @transform_0, window_bounds = array<i64: 8, 2>}, {pipeline_mode = #tpu.pipeline_mode<synchronous>, transform_indices = @transform_1, window_bounds = array<i64: 2, 128>}, {pipeline_mode = #tpu.pipeline_mode<synchronous>, transform_indices = @transform_2, window_bounds = array<i64: 1, 128>}, {pipeline_mode = #tpu.pipeline_mode<synchronous>, transform_indices = @transform_3, window_bounds = array<i64: 128, 128>}, {pipeline_mode = #tpu.pipeline_mode<synchronous>, transform_indices = @transform_4, window_bounds = array<i64: 1, 128>}, {pipeline_mode = #tpu.pipeline_mode<synchronous>, transform_indices = @transform_5, window_bounds = array<i64: 128, 2>}, {pipeline_mode = #tpu.pipeline_mode<synchronous>, transform_indices = @transform_6, window_bounds = array<i64: 1, 2>}, {transform_indices = @transform_7, window_bounds = array<i64: 8, 2>}]} {
    %c0 = arith.constant 0 : index
    %c0_0 = arith.constant 0 : index
    %0 = vector.load %arg1[%c0, %c0_0] : memref<8x2xf32, #tpu.memory_space<vmem>>, vector<8x2xf32>
    %c0_1 = arith.constant 0 : index
    %c0_2 = arith.constant 0 : index
    %1 = vector.load %arg2[%c0_1, %c0_2] : memref<2x128xf32, #tpu.memory_space<vmem>>, vector<2x128xf32>
    %c0_3 = arith.constant 0 : index
    %c0_4 = arith.constant 0 : index
    %2 = vector.load %arg3[%c0_3, %c0_4] : memref<1x128xf32, #tpu.memory_space<vmem>>, vector<1x128xf32>
    %3 = vector.extract_strided_slice %0 {offsets = [0, 0], sizes = [8, 1], strides = [1, 1]} : vector<8x2xf32> to vector<8x1xf32>
    %4 = vector.extract_strided_slice %1 {offsets = [0, 0], sizes = [1, 128], strides = [1, 1]} : vector<2x128xf32> to vector<1x128xf32>
    %5 = vector.broadcast %3 : vector<8x1xf32> to vector<8x128xf32>
    %6 = vector.broadcast %4 : vector<1x128xf32> to vector<8x128xf32>
    %7 = arith.mulf %5, %6 : vector<8x128xf32>
    %8 = vector.broadcast %2 : vector<1x128xf32> to vector<8x128xf32>
    %9 = arith.addf %8, %7 : vector<8x128xf32>
    %10 = vector.extract_strided_slice %0 {offsets = [0, 1], sizes = [8, 1], strides = [1, 1]} : vector<8x2xf32> to vector<8x1xf32>
    %11 = vector.extract_strided_slice %1 {offsets = [1, 0], sizes = [1, 128], strides = [1, 1]} : vector<2x128xf32> to vector<1x128xf32>
    %12 = vector.broadcast %10 : vector<8x1xf32> to vector<8x128xf32>
    %13 = vector.broadcast %11 : vector<1x128xf32> to vector<8x128xf32>
    %14 = arith.mulf %12, %13 : vector<8x128xf32>
    %15 = arith.addf %9, %14 : vector<8x128xf32>
    %cst = arith.constant 0.000000e+00 : f32
    %16 = vector.broadcast %cst : f32 to vector<8x128xf32>
    %17 = arith.maximumf %15, %16 : vector<8x128xf32>
    %c0_5 = arith.constant 0 : index
    %c0_6 = arith.constant 0 : index
    %18 = vector.load %arg4[%c0_5, %c0_6] : memref<128x128xf32, #tpu.memory_space<vmem>>, vector<128x128xf32>
    %cst_7 = arith.constant dense<0.000000e+00> : vector<8x128xf32>
    %19 = tpu.matmul %17, %18, %cst_7 {dimension_numbers = #tpu.dot_dimension_numbers<[1], [0], [0], [1], [0, 0, 1, 1], [], []>} : vector<8x128xf32>, vector<128x128xf32>, vector<8x128xf32> -> vector<8x128xf32>
    %c0_8 = arith.constant 0 : index
    %c0_9 = arith.constant 0 : index
    %20 = vector.load %arg5[%c0_8, %c0_9] : memref<1x128xf32, #tpu.memory_space<vmem>>, vector<1x128xf32>
    %21 = vector.broadcast %20 : vector<1x128xf32> to vector<8x128xf32>
    %22 = arith.addf %19, %21 : vector<8x128xf32>
    %cst_10 = arith.constant 0.000000e+00 : f32
    %23 = vector.broadcast %cst_10 : f32 to vector<8x128xf32>
    %24 = arith.maximumf %22, %23 : vector<8x128xf32>
    %c0_11 = arith.constant 0 : index
    %c0_12 = arith.constant 0 : index
    %25 = vector.load %arg6[%c0_11, %c0_12] : memref<128x2xf32, #tpu.memory_space<vmem>>, vector<128x2xf32>
    %cst_13 = arith.constant dense<0.000000e+00> : vector<8x2xf32>
    %26 = tpu.matmul %24, %25, %cst_13 {dimension_numbers = #tpu.dot_dimension_numbers<[1], [0], [0], [1], [0, 0, 1, 1], [], []>} : vector<8x128xf32>, vector<128x2xf32>, vector<8x2xf32> -> vector<8x2xf32>
    %c0_14 = arith.constant 0 : index
    %c0_15 = arith.constant 0 : index
    %27 = vector.load %arg7[%c0_14, %c0_15] : memref<1x2xf32, #tpu.memory_space<vmem>>, vector<1x2xf32>
    %28 = vector.broadcast %27 : vector<1x2xf32> to vector<8x2xf32>
    %29 = arith.addf %26, %28 : vector<8x2xf32>
    %c0_16 = arith.constant 0 : index
    %c0_17 = arith.constant 0 : index
    %30 = vector.load %arg8[%c0_16, %c0_17] : memref<8x2xf32, #tpu.memory_space<vmem>>, vector<8x2xf32>
    tpu.vector_store %arg8[%c0_16, %c0_17], %29 {strides = array<i32>} : memref<8x2xf32, #tpu.memory_space<vmem>>, vector<8x2xf32>,
    return
  }
  func.func @transform_0(%arg0: i32) -> (i32, i32) {
    %c0_i32 = arith.constant 0 : i32
    %c0_i32_0 = arith.constant 0 : i32
    return %arg0, %c0_i32 : i32, i32
  }
  func.func @transform_1(%arg0: i32) -> (i32, i32) {
    %c0_i32 = arith.constant 0 : i32
    %c0_i32_0 = arith.constant 0 : i32
    %c0_i32_1 = arith.constant 0 : i32
    return %c0_i32, %c0_i32_0 : i32, i32
  }
  func.func @transform_2(%arg0: i32) -> (i32, i32) {
    %c0_i32 = arith.constant 0 : i32
    %c0_i32_0 = arith.constant 0 : i32
    %c0_i32_1 = arith.constant 0 : i32
    return %c0_i32, %c0_i32_0 : i32, i32
  }
  func.func @transform_3(%arg0: i32) -> (i32, i32) {
    %c0_i32 = arith.constant 0 : i32
    %c0_i32_0 = arith.constant 0 : i32
    %c0_i32_1 = arith.constant 0 : i32
    return %c0_i32, %c0_i32_0 : i32, i32
  }
  func.func @transform_4(%arg0: i32) -> (i32, i32) {
    %c0_i32 = arith.constant 0 : i32
    %c0_i32_0 = arith.constant 0 : i32
    %c0_i32_1 = arith.constant 0 : i32
    return %c0_i32, %c0_i32_0 : i32, i32
  }
  func.func @transform_5(%arg0: i32) -> (i32, i32) {
    %c0_i32 = arith.constant 0 : i32
    %c0_i32_0 = arith.constant 0 : i32
    %c0_i32_1 = arith.constant 0 : i32
    return %c0_i32, %c0_i32_0 : i32, i32
  }
  func.func @transform_6(%arg0: i32) -> (i32, i32) {
    %c0_i32 = arith.constant 0 : i32
    %c0_i32_0 = arith.constant 0 : i32
    %c0_i32_1 = arith.constant 0 : i32
    return %c0_i32, %c0_i32_0 : i32, i32
  }
  func.func @transform_7(%arg0: i32) -> (i32, i32) {
    %c0_i32 = arith.constant 0 : i32
    %c0_i32_0 = arith.constant 0 : i32
    return %arg0, %c0_i32 : i32, i32
  }
}

</mosaic_0001>

<llo_original>
// kernel: tpu_custom_call.1
$region0: #{tpu_custom_call.1}
  #allocation0 [shape = 'u32[]', space=smem, size = 0x4, offset = 0x4, fixed_abs, tag = 'smem constant byte address 0x4 - core index']
  #allocation1 [shape = 'u32[144,128]{1,0:T(1,128)}', space=vmem, size = 0x12000, scoped, tag = 'internal scratch']
  %s0 = inlined_call_operand.vmem [shape: f32[8,2], index: 0, kind: input, shape index: {}]
  %s1 = inlined_call_operand.vmem [shape: f32[2,128], index: 1, kind: input, shape index: {}]
  %s2 = inlined_call_operand.vmem [shape: f32[1,128], index: 2, kind: input, shape index: {}]
  %s3 = inlined_call_operand.vmem [shape: f32[128,128], index: 3, kind: input, shape index: {}]
  %s4 = inlined_call_operand.vmem [shape: f32[1,128], index: 4, kind: input, shape index: {}]
  %s5 = inlined_call_operand.vmem [shape: f32[128,2], index: 5, kind: input, shape index: {}]
  %s6 = inlined_call_operand.vmem [shape: f32[1,2], index: 6, kind: input, shape index: {}]
  %s7 = inlined_call_operand.vmem [shape: f32[8,2], index: 7, kind: output, shape index: {}]
  %s8 = sld [smem:[#allocation0]]
  $region38: #{tpu_custom_call.1} parent=0
    _
  %s10 = ssub.s32 1, %s8
  %s11 = scalar_select 0, %s10, %s8
  // Predicated region
  $region2: #{tpu_custom_call.1} parent=0 // pred_check
    _
  $region3: #{tpu_custom_call.1} parent=0 // pred_check_branch
    %13 = sbr.rel (0) target = $region5
  $region4: #{tpu_custom_call.1} parent=0 // pred_region
    _
  $region5: #{tpu_custom_call.1} parent=0 // pred_fallthru
    _
  // Predicated region
  $region6: #{tpu_custom_call.1} parent=0 // pred_check
    _
  $region7: #{tpu_custom_call.1} parent=0 // pred_check_branch
    %15 = sbr.rel (0) target = $region9
  $region8: #{tpu_custom_call.1} parent=0 // pred_region
    _
  $region9: #{tpu_custom_call.1} parent=0 // pred_fallthru
    _
  // Predicated region
  $region10: #{tpu_custom_call.1} parent=0 // pred_check
    _
  $region11: #{tpu_custom_call.1} parent=0 // pred_check_branch
    %17 = sbr.rel (0) target = $region13
  $region12: #{tpu_custom_call.1} parent=0 // pred_region
    _
  $region13: #{tpu_custom_call.1} parent=0 // pred_fallthru
    _
  // Predicated region
  $region14: #{tpu_custom_call.1} parent=0 // pred_check
    _
  $region15: #{tpu_custom_call.1} parent=0 // pred_check_branch
    %19 = sbr.rel (0) target = $region17
  $region16: #{tpu_custom_call.1} parent=0 // pred_region
    _
  $region17: #{tpu_custom_call.1} parent=0 // pred_fallthru
    _
  // Predicated region
  $region18: #{tpu_custom_call.1} parent=0 // pred_check
    _
  $region19: #{tpu_custom_call.1} parent=0 // pred_check_branch
    %21 = sbr.rel (0) target = $region21
  $region20: #{tpu_custom_call.1} parent=0 // pred_region
    _
  $region21: #{tpu_custom_call.1} parent=0 // pred_fallthru
    _
  // Predicated region
  $region22: #{tpu_custom_call.1} parent=0 // pred_check
    _
  $region23: #{tpu_custom_call.1} parent=0 // pred_check_branch
    %23 = sbr.rel (0) target = $region25
  $region24: #{tpu_custom_call.1} parent=0 // pred_region
    _
  $region25: #{tpu_custom_call.1} parent=0 // pred_fallthru
    _
  // Predicated region
  $region26: #{tpu_custom_call.1} parent=0 // pred_check
    _
  $region27: #{tpu_custom_call.1} parent=0 // pred_check_branch
    %25 = sbr.rel (0) target = $region29
  $region28: #{tpu_custom_call.1} parent=0 // pred_region
    _
  $region29: #{tpu_custom_call.1} parent=0 // pred_fallthru
    _
  %v26 = vld [vmem:[%s0] sm:$0xff]
  %v27 = vld [vmem:[%s1] sm:$0x3]
  %v28 = vld [vmem:[%s2] sm:$0x1]
  %30 = vset.pattern.permute.xlu0 0
  %31 = vperm.xlu0 %30, %v26
  %v32 = vpop.permute.xlu0 %31
  %v34 = vlaneseq
  %v35 = vshrl.u32 %v34, 7
  %v36 = vsub.s32 0, %v35
  %v37 = vrot.slane %v27, %v36
  %v38 = vmul.f32 %v32, %v37
  %v40 = vlaneseq
  %v41 = vshrl.u32 %v40, 7
  %v42 = vsub.s32 0, %v41
  %v43 = vrot.slane %v28, %v42
  %v45 = vadd.f32 %v43, %v38
  %46 = vset.pattern.permute.xlu0 1
  %47 = vperm.xlu0 %46, %v26
  %v48 = vpop.permute.xlu0 %47
  %v50 = vlaneseq
  %v51 = vshrl.u32 %v50, 7
  %v52 = vsub.s32 1, %v51
  %v53 = vrot.slane %v27, %v52
  %v54 = vmul.f32 %v48, %v53
  %v55 = vadd.f32 %v45, %v54
  %v56 = vmax.f32 %v55, 0.0
  %v57 = vld [vmem:[%s3] sm:$0xff]
  %v58 = vld [vmem:[%s3 + $0x8] sm:$0xff]
  %v59 = vld [vmem:[%s3 + $0x10] sm:$0xff]
  %v60 = vld [vmem:[%s3 + $0x18] sm:$0xff]
  %v61 = vld [vmem:[%s3 + $0x20] sm:$0xff]
  %v62 = vld [vmem:[%s3 + $0x28] sm:$0xff]
  %v63 = vld [vmem:[%s3 + $0x30] sm:$0xff]
  %v64 = vld [vmem:[%s3 + $0x38] sm:$0xff]
  %v65 = vld [vmem:[%s3 + $0x40] sm:$0xff]
  %v66 = vld [vmem:[%s3 + $0x48] sm:$0xff]
  %v67 = vld [vmem:[%s3 + $0x50] sm:$0xff]
  %v68 = vld [vmem:[%s3 + $0x58] sm:$0xff]
  %v69 = vld [vmem:[%s3 + $0x60] sm:$0xff]
  %v70 = vld [vmem:[%s3 + $0x68] sm:$0xff]
  %v71 = vld [vmem:[%s3 + $0x70] sm:$0xff]
  %v72 = vld [vmem:[%s3 + $0x78] sm:$0xff]
  %v73 = vld [vmem:[%s4] sm:$0x1]
  %v75 = vlaneseq
  %v76 = vshrl.u32 %v75, 7
  %v77 = vsub.s32 0, %v76
  %v78 = vrot.slane %v73, %v77
  %80 = vmatprep.subr.mxu0 0.0
  %81 = vmatpush1.msra.mxu0 %v72
  %82 = vmatprep.subr.mxu0 0.0
  %83 = vmatpush1.msra.mxu0 %v71
  %84 = vmatprep.subr.mxu0 0.0
  %85 = vmatpush1.msra.mxu0 %v70
  %86 = vmatprep.subr.mxu0 0.0
  %87 = vmatpush1.msra.mxu0 %v69
  %88 = vmatprep.subr.mxu0 0.0
  %89 = vmatpush1.msra.mxu0 %v68
  %90 = vmatprep.subr.mxu0 0.0
  %91 = vmatpush1.msra.mxu0 %v67
  %92 = vmatprep.subr.mxu0 0.0
  %93 = vmatpush1.msra.mxu0 %v66
  %94 = vmatprep.subr.mxu0 0.0
  %95 = vmatpush1.msra.mxu0 %v65
  %96 = vmatprep.subr.mxu0 0.0
  %97 = vmatpush1.msra.mxu0 %v64
  %98 = vmatprep.subr.mxu0 0.0
  %99 = vmatpush1.msra.mxu0 %v63
  %100 = vmatprep.subr.mxu0 0.0
  %101 = vmatpush1.msra.mxu0 %v62
  %102 = vmatprep.subr.mxu0 0.0
  %103 = vmatpush1.msra.mxu0 %v61
  %104 = vmatprep.subr.mxu0 0.0
  %105 = vmatpush1.msra.mxu0 %v60
  %106 = vmatprep.subr.mxu0 0.0
  %107 = vmatpush1.msra.mxu0 %v59
  %108 = vmatprep.subr.mxu0 0.0
  %109 = vmatpush1.msra.mxu0 %v58
  %110 = vmatprep.subr.mxu0 0.0
  %111 = vmatpush1.msra.mxu0 %v57
  %112 = vmatprep.subr.mxu0 0.0
  %113 = vmatpush2.msra.mxu0 0.0
  %114 = vmatprep.subr.mxu0 0.0
  %115 = vmatpush2.msra.mxu0 0.0
  %116 = vmatprep.subr.mxu0 0.0
  %117 = vmatpush2.msra.mxu0 0.0
  %118 = vmatprep.subr.mxu0 0.0
  %119 = vmatpush2.msra.mxu0 0.0
  %120 = vmatprep.subr.mxu0 0.0
  %121 = vmatpush2.msra.mxu0 0.0
  %122 = vmatprep.subr.mxu0 0.0
  %123 = vmatpush2.msra.mxu0 0.0
  %124 = vmatprep.subr.mxu0 0.0
  %125 = vmatpush2.msra.mxu0 0.0
  %126 = vmatprep.subr.mxu0 0.0
  %127 = vmatpush2.msra.mxu0 0.0
  %128 = vmatprep.subr.mxu0 0.0
  %129 = vmatpush2.msra.mxu0 0.0
  %130 = vmatprep.subr.mxu0 0.0
  %131 = vmatpush2.msra.mxu0 0.0
  %132 = vmatprep.subr.mxu0 0.0
  %133 = vmatpush2.msra.mxu0 0.0
  %134 = vmatprep.subr.mxu0 0.0
  %135 = vmatpush2.msra.mxu0 0.0
  %136 = vmatprep.subr.mxu0 0.0
  %137 = vmatpush2.msra.mxu0 0.0
  %138 = vmatprep.subr.mxu0 0.0
  %139 = vmatpush2.msra.mxu0 0.0
  %140 = vmatprep.subr.mxu0 0.0
  %141 = vmatpush2.msra.mxu0 0.0
  %142 = vmatprep.subr.mxu0 0.0
  %143 = vmatpush2.msra.mxu0 0.0
  %144 = vmatprep.mubr.f32.mxu0 0.0
  %145 = vmatmul.mubr.f32.gmra.mxu0 %v56
  %v146 = vpop.f32.mrf.mxu0
  %v147 = vadd.f32 %v78, %v146
  %v148 = vpop.f32.mrf.mxu0
  %149 = vdwg.mxu0
  %v150 = vmax.f32 %v147, 0.0
  %v151 = vld [vmem:[%s5] sm:$0xff]
  %v152 = vld [vmem:[%s5 + $0x8] sm:$0xff]
  %v153 = vld [vmem:[%s5 + $0x10] sm:$0xff]
  %v154 = vld [vmem:[%s5 + $0x18] sm:$0xff]
  %v155 = vld [vmem:[%s5 + $0x20] sm:$0xff]
  %v156 = vld [vmem:[%s5 + $0x28] sm:$0xff]
  %v157 = vld [vmem:[%s5 + $0x30] sm:$0xff]
  %v158 = vld [vmem:[%s5 + $0x38] sm:$0xff]
  %v159 = vld [vmem:[%s5 + $0x40] sm:$0xff]
  %v160 = vld [vmem:[%s5 + $0x48] sm:$0xff]
  %v161 = vld [vmem:[%s5 + $0x50] sm:$0xff]
  %v162 = vld [vmem:[%s5 + $0x58] sm:$0xff]
  %v163 = vld [vmem:[%s5 + $0x60] sm:$0xff]
  %v164 = vld [vmem:[%s5 + $0x68] sm:$0xff]
  %v165 = vld [vmem:[%s5 + $0x70] sm:$0xff]
  %v166 = vld [vmem:[%s5 + $0x78] sm:$0xff]
  %v167 = vld [vmem:[%s6] sm:$0x1]
  %v169 = vlaneseq
  %v170 = vshrl.u32 %v169, 7
  %v171 = vsub.s32 0, %v170
  %v172 = vrot.slane %v167, %v171
  %174 = vmatprep.subr.mxu0 0.0
  %175 = vmatpush1.msra.mxu0 %v166
  %176 = vmatprep.subr.mxu0 0.0
  %177 = vmatpush1.msra.mxu0 %v165
  %178 = vmatprep.subr.mxu0 0.0
  %179 = vmatpush1.msra.mxu0 %v164
  %180 = vmatprep.subr.mxu0 0.0
  %181 = vmatpush1.msra.mxu0 %v163
  %182 = vmatprep.subr.mxu0 0.0
  %183 = vmatpush1.msra.mxu0 %v162
  %184 = vmatprep.subr.mxu0 0.0
  %185 = vmatpush1.msra.mxu0 %v161
  %186 = vmatprep.subr.mxu0 0.0
  %187 = vmatpush1.msra.mxu0 %v160
  %188 = vmatprep.subr.mxu0 0.0
  %189 = vmatpush1.msra.mxu0 %v159
  %190 = vmatprep.subr.mxu0 0.0
  %191 = vmatpush1.msra.mxu0 %v158
  %192 = vmatprep.subr.mxu0 0.0
  %193 = vmatpush1.msra.mxu0 %v157
  %194 = vmatprep.subr.mxu0 0.0
  %195 = vmatpush1.msra.mxu0 %v156
  %196 = vmatprep.subr.mxu0 0.0
  %197 = vmatpush1.msra.mxu0 %v155
  %198 = vmatprep.subr.mxu0 0.0
  %199 = vmatpush1.msra.mxu0 %v154
  %200 = vmatprep.subr.mxu0 0.0
  %201 = vmatpush1.msra.mxu0 %v153
  %202 = vmatprep.subr.mxu0 0.0
  %203 = vmatpush1.msra.mxu0 %v152
  %204 = vmatprep.subr.mxu0 0.0
  %205 = vmatpush1.msra.mxu0 %v151
  %206 = vmatprep.subr.mxu0 0.0
  %207 = vmatpush2.msra.mxu0 0.0
  %208 = vmatprep.subr.mxu0 0.0
  %209 = vmatpush2.msra.mxu0 0.0
  %210 = vmatprep.subr.mxu0 0.0
  %211 = vmatpush2.msra.mxu0 0.0
  %212 = vmatprep.subr.mxu0 0.0
  %213 = vmatpush2.msra.mxu0 0.0
  %214 = vmatprep.subr.mxu0 0.0
  %215 = vmatpush2.msra.mxu0 0.0
  %216 = vmatprep.subr.mxu0 0.0
  %217 = vmatpush2.msra.mxu0 0.0
  %218 = vmatprep.subr.mxu0 0.0
  %219 = vmatpush2.msra.mxu0 0.0
  %220 = vmatprep.subr.mxu0 0.0
  %221 = vmatpush2.msra.mxu0 0.0
  %222 = vmatprep.subr.mxu0 0.0
  %223 = vmatpush2.msra.mxu0 0.0
  %224 = vmatprep.subr.mxu0 0.0
  %225 = vmatpush2.msra.mxu0 0.0
  %226 = vmatprep.subr.mxu0 0.0
  %227 = vmatpush2.msra.mxu0 0.0
  %228 = vmatprep.subr.mxu0 0.0
  %229 = vmatpush2.msra.mxu0 0.0
  %230 = vmatprep.subr.mxu0 0.0
  %231 = vmatpush2.msra.mxu0 0.0
  %232 = vmatprep.subr.mxu0 0.0
  %233 = vmatpush2.msra.mxu0 0.0
  %234 = vmatprep.subr.mxu0 0.0
  %235 = vmatpush2.msra.mxu0 0.0
  %236 = vmatprep.subr.mxu0 0.0
  %237 = vmatpush2.msra.mxu0 0.0
  %238 = vmatprep.mubr.f32.mxu0 0.0
  %239 = vmatmul.mubr.f32.gmra.mxu0 %v150
  %v240 = vpop.f32.mrf.mxu0
  %v241 = vadd.f32 %v172, %v240
  %v242 = vpop.f32.mrf.mxu0
  %243 = vdwg.mxu0
  %vm244 = vcmask 15360
  %245 = vst.msk [vmem:[%s7] sm:$0xff] %vm244, %v241
  // Predicated region
  $region30: #{tpu_custom_call.1} parent=0 // pred_check
    _
  $region31: #{tpu_custom_call.1} parent=0 // pred_check_branch
    %247 = sbr.rel (0) target = $region33
  $region32: #{tpu_custom_call.1} parent=0 // pred_region
    _
  $region33: #{tpu_custom_call.1} parent=0 // pred_fallthru
    _
  // Predicated region
  $region34: #{tpu_custom_call.1} parent=0 // pred_check
    _
  $region35: #{tpu_custom_call.1} parent=0 // pred_check_branch
    %249 = sbr.rel (0) target = $region37
  $region36: #{tpu_custom_call.1} parent=0 // pred_region
    _
  $region37: #{tpu_custom_call.1} parent=0 // pred_fallthru
    _

</llo_original>
